<compile_context>
chip_gen: v5e
topology: v5e:2x2
jax: 0.10.0
libtpu: 0.0.40
codegen_flags: <defaults>
</compile_context>

<pallas_src>
import jax
import jax.numpy as jnp
from jax.experimental import pallas as pl
from jax.experimental.pallas import tpu as pltpu


def mlp_kernel(x_ref, w1_ref, b1_ref, w2_ref, b2_ref, w3_ref, b3_ref, o_ref):
    # Layer 1: Linear(input_dim, 512) + ReLU  (bf16 MXU, f32 accumulate)
    x_bf = x_ref[...].astype(jnp.bfloat16)
    h1 = jnp.dot(x_bf, w1_ref[...], preferred_element_type=jnp.float32)
    h1 = jnp.maximum(h1 + b1_ref[...], 0.0)

    # Dropout(0.3): identity at inference (eval) time.
    # TODO(synk): training-mode dropout not implemented.

    # Layer 2: Linear(512, 128) + ReLU  (bf16 MXU, f32 accumulate)
    h2 = jnp.dot(h1.astype(jnp.bfloat16), w2_ref[...],
                 preferred_element_type=jnp.float32)
    h2 = jnp.maximum(h2 + b2_ref[...], 0.0)

    # Layer 3: Linear(128, 1) as VPU multiply + lane reduction (keeps MXU free;
    # an N=1 matmul would use 1 of 256 MXU output columns).
    out = jnp.sum(h2 * w3_ref[...], axis=-1, keepdims=True) + b3_ref[...]
    o_ref[...] = out


def _pick_block_batch(batch):
    """Largest tile that evenly divides batch (multiple of 8 for sublanes,
    >=256 preferred to fill MXU rows and amortize per-step overhead)."""
    for tb in (1024, 512, 256, 128, 64, 32, 16, 8):
        if batch % tb == 0:
            return tb
    return batch  # odd small batch: single block


def neural_network_forward(x, params, *, block_batch=None):
    """x: (batch, input_dim) float32 -> (batch, 1) float32."""
    w1, b1, w2, b2, w3, b3 = params
    batch, input_dim = x.shape
    tb = block_batch if block_batch is not None else _pick_block_batch(batch)
    assert batch % tb == 0, "block_batch must divide batch"
    grid = (batch // tb,)

    def resident(arr):
        # Full-array block with a constant index_map: stays in VMEM across the
        # whole batch grid (no re-DMA per step).
        return pl.BlockSpec(arr.shape, lambda i: (0, 0))

    return pl.pallas_call(
        mlp_kernel,
        out_shape=jax.ShapeDtypeStruct((batch, 1), jnp.float32),
        grid_spec=pltpu.PrefetchScalarGridSpec(
            num_scalar_prefetch=0,
            grid=grid,
            in_specs=[
                pl.BlockSpec((tb, input_dim), lambda i: (i, 0)),  # x: tiled + double-buffered
                resident(w1), resident(b1),
                resident(w2), resident(b2),
                resident(w3), resident(b3),
            ],
            out_specs=pl.BlockSpec((tb, 1), lambda i: (i, 0)),
        ),
        compiler_params=pltpu.CompilerParams(
            dimension_semantics=("parallel",),  # v7x: shard batch across 2 TCs
        ),
    )(x, w1, b1, w2, b2, w3, b3)


def init_params(key, input_dim):
    """Deterministic init mirroring nn.Linear shapes.

    PyTorch weight is (out, in); w1/w2 are stored transposed (in, out) and in
    bf16 so the hot path is a native bf16 MXU `x @ W`. w3 is kept as an f32
    (1, 128) row for the VPU final projection. Biases are f32 (1, out).
    """
    k1, k2, k3, k4, k5, k6 = jax.random.split(key, 6)

    def linear(kw, kb, fan_in, fan_out, w_dtype=jnp.float32):
        bound = 1.0 / (fan_in ** 0.5)
        w = jax.random.uniform(kw, (fan_in, fan_out), jnp.float32, -bound, bound)
        b = jax.random.uniform(kb, (1, fan_out), jnp.float32, -bound, bound)
        return w.astype(w_dtype), b

    w1, b1 = linear(k1, k2, input_dim, 512, jnp.bfloat16)
    w2, b2 = linear(k3, k4, 512, 128, jnp.bfloat16)
    w3_col, b3 = linear(k5, k6, 128, 1, jnp.float32)
    w3 = w3_col.T  # (1, 128) row for broadcast-multiply
    return (w1, b1, w2, b2, w3, b3)


if __name__ == "__main__":
    key = jax.random.PRNGKey(0)
    k_x, k_p = jax.random.split(key)

    batch, input_dim = 64, 32
    x = jax.random.normal(k_x, (batch, input_dim), dtype=jnp.float32)
    params = init_params(k_p, input_dim)

    # block_batch=16 exercises a 4-step batch grid with resident weights.
    out = neural_network_forward(x, params, block_batch=16)
    jax.block_until_ready(out)

    # Reference forward (same bf16-input / f32-accumulate recipe as the kernel).
    w1, b1, w2, b2, w3, b3 = params
    xb = x.astype(jnp.bfloat16)
    h1 = jnp.maximum(jnp.dot(xb, w1, preferred_element_type=jnp.float32) + b1, 0.0)
    h2 = jnp.maximum(
        jnp.dot(h1.astype(jnp.bfloat16), w2, preferred_element_type=jnp.float32) + b2,
        0.0)
    ref = jnp.sum(h2 * w3, axis=-1, keepdims=True) + b3

    assert out.shape == (batch, 1)
    assert jnp.allclose(out, ref, atol=1e-2, rtol=1e-2), \
        f"max abs err {jnp.max(jnp.abs(out - ref))}"

    print("KERNEL_OK")
</pallas_src>

<mosaic_0001>
module attributes {stable_mosaic.version = 11 : i64} {
  func.func @mlp_kernel(%arg0: i32, %arg1: memref<16x32xf32, #tpu.memory_space<vmem>>, %arg2: memref<32x512xbf16, #tpu.memory_space<vmem>>, %arg3: memref<1x512xf32, #tpu.memory_space<vmem>>, %arg4: memref<512x128xbf16, #tpu.memory_space<vmem>>, %arg5: memref<1x128xf32, #tpu.memory_space<vmem>>, %arg6: memref<1x128xf32, #tpu.memory_space<vmem>>, %arg7: memref<1x1xf32, #tpu.memory_space<vmem>>, %arg8: memref<16x1xf32, #tpu.memory_space<vmem>>) attributes {dimension_semantics = [#tpu.dimension_semantics<parallel>], iteration_bounds = array<i64: 4>, scalar_prefetch = 0 : i64, scratch_operands = 0 : i64, tpu.core_type = #tpu.core_type<tc>, window_params = [{transform_indices = @transform_0, window_bounds = array<i64: 16, 32>}, {pipeline_mode = #tpu.pipeline_mode<synchronous>, transform_indices = @transform_1, window_bounds = array<i64: 32, 512>}, {pipeline_mode = #tpu.pipeline_mode<synchronous>, transform_indices = @transform_2, window_bounds = array<i64: 1, 512>}, {pipeline_mode = #tpu.pipeline_mode<synchronous>, transform_indices = @transform_3, window_bounds = array<i64: 512, 128>}, {pipeline_mode = #tpu.pipeline_mode<synchronous>, transform_indices = @transform_4, window_bounds = array<i64: 1, 128>}, {pipeline_mode = #tpu.pipeline_mode<synchronous>, transform_indices = @transform_5, window_bounds = array<i64: 1, 128>}, {pipeline_mode = #tpu.pipeline_mode<synchronous>, transform_indices = @transform_6, window_bounds = array<i64: 1, 1>}, {transform_indices = @transform_7, window_bounds = array<i64: 16, 1>}]} {
    %c0 = arith.constant 0 : index
    %c0_0 = arith.constant 0 : index
    %0 = vector.load %arg1[%c0, %c0_0] : memref<16x32xf32, #tpu.memory_space<vmem>>, vector<16x32xf32>
    %1 = arith.truncf %0 : vector<16x32xf32> to vector<16x32xbf16>
    %c0_1 = arith.constant 0 : index
    %c0_2 = arith.constant 0 : index
    %2 = vector.load %arg2[%c0_1, %c0_2] : memref<32x512xbf16, #tpu.memory_space<vmem>>, vector<32x512xbf16>
    %cst = arith.constant dense<0.000000e+00> : vector<16x512xf32>
    %3 = tpu.matmul %1, %2, %cst {dimension_numbers = #tpu.dot_dimension_numbers<[1], [0], [0], [1], [0, 0, 1, 1], [], []>} : vector<16x32xbf16>, vector<32x512xbf16>, vector<16x512xf32> -> vector<16x512xf32>
    %c0_3 = arith.constant 0 : index
    %c0_4 = arith.constant 0 : index
    %4 = vector.load %arg3[%c0_3, %c0_4] : memref<1x512xf32, #tpu.memory_space<vmem>>, vector<1x512xf32>
    %5 = vector.broadcast %4 : vector<1x512xf32> to vector<16x512xf32>
    %6 = arith.addf %3, %5 : vector<16x512xf32>
    %cst_5 = arith.constant 0.000000e+00 : f32
    %7 = vector.broadcast %cst_5 : f32 to vector<16x512xf32>
    %8 = arith.maximumf %6, %7 : vector<16x512xf32>
    %9 = arith.truncf %8 : vector<16x512xf32> to vector<16x512xbf16>
    %c0_6 = arith.constant 0 : index
    %c0_7 = arith.constant 0 : index
    %10 = vector.load %arg4[%c0_6, %c0_7] : memref<512x128xbf16, #tpu.memory_space<vmem>>, vector<512x128xbf16>
    %cst_8 = arith.constant dense<0.000000e+00> : vector<16x128xf32>
    %11 = tpu.matmul %9, %10, %cst_8 {dimension_numbers = #tpu.dot_dimension_numbers<[1], [0], [0], [1], [0, 0, 1, 1], [], []>} : vector<16x512xbf16>, vector<512x128xbf16>, vector<16x128xf32> -> vector<16x128xf32>
    %c0_9 = arith.constant 0 : index
    %c0_10 = arith.constant 0 : index
    %12 = vector.load %arg5[%c0_9, %c0_10] : memref<1x128xf32, #tpu.memory_space<vmem>>, vector<1x128xf32>
    %13 = vector.broadcast %12 : vector<1x128xf32> to vector<16x128xf32>
    %14 = arith.addf %11, %13 : vector<16x128xf32>
    %cst_11 = arith.constant 0.000000e+00 : f32
    %15 = vector.broadcast %cst_11 : f32 to vector<16x128xf32>
    %16 = arith.maximumf %14, %15 : vector<16x128xf32>
    %c0_12 = arith.constant 0 : index
    %c0_13 = arith.constant 0 : index
    %17 = vector.load %arg6[%c0_12, %c0_13] : memref<1x128xf32, #tpu.memory_space<vmem>>, vector<1x128xf32>
    %18 = vector.broadcast %17 : vector<1x128xf32> to vector<16x128xf32>
    %19 = arith.mulf %16, %18 : vector<16x128xf32>
    %cst_14 = arith.constant dense<0.000000e+00> : vector<16xf32>
    %20 = vector.multi_reduction <add>, %19, %cst_14 [1] : vector<16x128xf32> to vector<16xf32>
    %21 = vector.shape_cast %20 : vector<16xf32> to vector<16x1xf32>
    %c0_15 = arith.constant 0 : index
    %c0_16 = arith.constant 0 : index
    %22 = vector.load %arg7[%c0_15, %c0_16] : memref<1x1xf32, #tpu.memory_space<vmem>>, vector<1x1xf32>
    %23 = vector.broadcast %22 : vector<1x1xf32> to vector<16x1xf32>
    %24 = arith.addf %21, %23 : vector<16x1xf32>
    %c0_17 = arith.constant 0 : index
    %c0_18 = arith.constant 0 : index
    %25 = vector.load %arg8[%c0_17, %c0_18] : memref<16x1xf32, #tpu.memory_space<vmem>>, vector<16x1xf32>
    tpu.vector_store %arg8[%c0_17, %c0_18], %24 {strides = array<i32>} : memref<16x1xf32, #tpu.memory_space<vmem>>, vector<16x1xf32>,
    return
  }
  func.func @transform_0(%arg0: i32) -> (i32, i32) {
    %c0_i32 = arith.constant 0 : i32
    %c0_i32_0 = arith.constant 0 : i32
    return %arg0, %c0_i32 : i32, i32
  }
  func.func @transform_1(%arg0: i32) -> (i32, i32) {
    %c0_i32 = arith.constant 0 : i32
    %c0_i32_0 = arith.constant 0 : i32
    %c0_i32_1 = arith.constant 0 : i32
    return %c0_i32, %c0_i32_0 : i32, i32
  }
  func.func @transform_2(%arg0: i32) -> (i32, i32) {
    %c0_i32 = arith.constant 0 : i32
    %c0_i32_0 = arith.constant 0 : i32
    %c0_i32_1 = arith.constant 0 : i32
    return %c0_i32, %c0_i32_0 : i32, i32
  }
  func.func @transform_3(%arg0: i32) -> (i32, i32) {
    %c0_i32 = arith.constant 0 : i32
    %c0_i32_0 = arith.constant 0 : i32
    %c0_i32_1 = arith.constant 0 : i32
    return %c0_i32, %c0_i32_0 : i32, i32
  }
  func.func @transform_4(%arg0: i32) -> (i32, i32) {
    %c0_i32 = arith.constant 0 : i32
    %c0_i32_0 = arith.constant 0 : i32
    %c0_i32_1 = arith.constant 0 : i32
    return %c0_i32, %c0_i32_0 : i32, i32
  }
  func.func @transform_5(%arg0: i32) -> (i32, i32) {
    %c0_i32 = arith.constant 0 : i32
    %c0_i32_0 = arith.constant 0 : i32
    %c0_i32_1 = arith.constant 0 : i32
    return %c0_i32, %c0_i32_0 : i32, i32
  }
  func.func @transform_6(%arg0: i32) -> (i32, i32) {
    %c0_i32 = arith.constant 0 : i32
    %c0_i32_0 = arith.constant 0 : i32
    %c0_i32_1 = arith.constant 0 : i32
    return %c0_i32, %c0_i32_0 : i32, i32
  }
  func.func @transform_7(%arg0: i32) -> (i32, i32) {
    %c0_i32 = arith.constant 0 : i32
    %c0_i32_0 = arith.constant 0 : i32
    return %arg0, %c0_i32 : i32, i32
  }
}

</mosaic_0001>

<llo_original>
// kernel: tpu_custom_call.1
$region0: #{tpu_custom_call.1}
  #allocation0 [shape = 'u32[]', space=smem, size = 0x4, offset = 0x4, fixed_abs, tag = 'smem constant byte address 0x4 - core index']
  #allocation1 [shape = 'u32[72,128]{1,0:T(1,128)}', space=vmem, size = 0x9000, scoped, tag = 'internal scratch']
  #allocation2 [shape = 'f32[1,1]{1,0:T(1,128)S(1)}', space=vmem, size = 0x200, scoped, tag = 'scoped memory for tpu_custom_call.1']
  %s0 = inlined_call_operand.vmem [shape: f32[64,32], index: 0, kind: input, shape index: {}]
  %s1 = inlined_call_operand.vmem [shape: bf16[32,512], index: 1, kind: input, shape index: {}]
  %s2 = inlined_call_operand.vmem [shape: f32[1,512], index: 2, kind: input, shape index: {}]
  %s3 = inlined_call_operand.hbm [shape: bf16[512,128], index: 3, kind: input, shape index: {}]
  %s4 = inlined_call_operand.vmem [shape: f32[1,128], index: 4, kind: input, shape index: {}]
  %s5 = inlined_call_operand.vmem [shape: f32[1,128], index: 5, kind: input, shape index: {}]
  %s6 = inlined_call_operand.<no memory space> [shape: f32[1,1], index: 6, kind: input, shape index: {}]
  %s7 = inlined_call_operand.vmem [shape: f32[64,1], index: 7, kind: output, shape index: {}]
  %s8 = sld [smem:[#allocation0]]
  $region65: #{tpu_custom_call.1} parent=0
    _
  %s10 = ssub.s32 1, %s8
  %s11 = scalar_select 0, %s10, %s8
  %v12 = vstv %s6
  %13 = vst [vmem:[#allocation2] sm:$0x1] %v12
  $region1: #{tpu_custom_call.1} parent=0
    #allocation3 [shape = 'u8[131072]{0}', space=vmem, size = 0x20000, scoped, tag = 'input window, operand 3, single buffered']
    #allocation4 [shape = 's32[2]{0}', space=sflag, size = 0x8, scoped, tag = 'scoped memory for tpu_custom_call.1']
    %14 = vsyncpa [#allocation4], 0
    loop: start=0, step=1, limit=6
    $region2: #{tpu_custom_call.1} parent=1 // loop_pre_header
      _
    $region3: #{tpu_custom_call.1} parent=1 // loop_header
      %s16 = sphi 0, %s20
      %p17 = scmp.ge.s32.totalorder %s16, 6
      %s26 = sphi 0, %s28
      %s29 = sphi 0, %s26
      %s30 = sphi 0, %s29
      %s46 = sphi 0, %s30
      %s50 = sphi 0, %s50
      %s52 = sphi 0, %s50
      %s53 = sphi 0, %s52
      %s67 = sphi 0, %s53
      %s71 = sphi 0, %s71
      %s73 = sphi 0, %s71
      %s74 = sphi 0, %s73
      %s88 = sphi 0, %s74
      %s92 = sphi 0, %s92
      %s94 = sphi 0, %s92
      %s95 = sphi 0, %s94
      %s109 = sphi 0, %s95
      %s113 = sphi 0, %s113
      %s115 = sphi 0, %s113
      %s116 = sphi 0, %s115
      %s130 = sphi 0, %s116
      %s134 = sphi 0, %s134
      %s136 = sphi 0, %s134
      %s137 = sphi 0, %s136
      %s151 = sphi 0, %s137
      %s155 = sphi 0, %s155
      %s157 = sphi 0, %s155
      %s158 = sphi 0, %s157
      %s172 = sphi 0, %s158
      %s178 = sphi 0, %s180
      %s181 = sphi 0, %s178
      %s182 = sphi 0, %s181
      %s198 = sphi 0, %s182
    $region4: #{tpu_custom_call.1} parent=1 // loop_header_branch
      %19 = sbr.rel (%p17) target = $region8
    $region5: #{tpu_custom_call.1} parent=1 // loop_body
      %s21 = ssub.s32 %s16, 1
      %s22 = ssub.s32 %s16, 2
      %s23 = sadd.s32 %s16, 1
      %s24 = ssub.s32 %s16, %s23
      %p25 = scmp.eq.s32.totalorder %s24, 0
      %s27 = sadd.s32 %s26, 1
      %s28 = scalar_select %p25, %s26, %s27
      %p31 = pneg %p25
      %p32 = scmp.eq.s32.totalorder %s16, 3
      %p33 = por %p31, %p32
      %p34 = scmp.ne.s32.totalorder %s26, %s29
      %p35 = scmp.eq.s32.totalorder %s16, 0
      %p36 = por %p34, %p35
      %p37 = scmp.ne.s32.totalorder %s26, %s29
      %p38 = scmp.eq.s32.totalorder %s21, 3
      %p39 = por %p37, %p38
      %p40 = scmp.ne.s32.totalorder %s29, %s30
      %p41 = scmp.eq.s32.totalorder %s21, 0
      %p42 = por %p40, %p41
      %p43 = scmp.ne.s32.totalorder %s29, %s30
      %p44 = scmp.eq.s32.totalorder %s22, 3
      %p45 = por %p43, %p44
      %p47 = scmp.ne.s32.totalorder %s30, %s46
      %p48 = scmp.eq.s32.totalorder %s22, 0
      %p49 = por %p47, %p48
      %s51 = sadd.s32 %s50, 1
      %p54 = scmp.eq.s32.totalorder %s16, 3
      %p55 = scmp.ne.s32.totalorder %s50, %s52
      %p56 = scmp.eq.s32.totalorder %s16, 0
      %p57 = por %p55, %p56
      %p58 = scmp.ne.s32.totalorder %s50, %s52
      %p59 = scmp.eq.s32.totalorder %s21, 3
      %p60 = por %p58, %p59
      %p61 = scmp.ne.s32.totalorder %s52, %s53
      %p62 = scmp.eq.s32.totalorder %s21, 0
      %p63 = por %p61, %p62
      %p64 = scmp.ne.s32.totalorder %s52, %s53
      %p65 = scmp.eq.s32.totalorder %s22, 3
      %p66 = por %p64, %p65
      %p68 = scmp.ne.s32.totalorder %s53, %s67
      %p69 = scmp.eq.s32.totalorder %s22, 0
      %p70 = por %p68, %p69
      %s72 = sadd.s32 %s71, 1
      %p75 = scmp.eq.s32.totalorder %s16, 3
      %p76 = scmp.ne.s32.totalorder %s71, %s73
      %p77 = scmp.eq.s32.totalorder %s16, 0
      %p78 = por %p76, %p77
      %p79 = scmp.ne.s32.totalorder %s71, %s73
      %p80 = scmp.eq.s32.totalorder %s21, 3
      %p81 = por %p79, %p80
      %p82 = scmp.ne.s32.totalorder %s73, %s74
      %p83 = scmp.eq.s32.totalorder %s21, 0
      %p84 = por %p82, %p83
      %p85 = scmp.ne.s32.totalorder %s73, %s74
      %p86 = scmp.eq.s32.totalorder %s22, 3
      %p87 = por %p85, %p86
      %p89 = scmp.ne.s32.totalorder %s74, %s88
      %p90 = scmp.eq.s32.totalorder %s22, 0
      %p91 = por %p89, %p90
      %s93 = sadd.s32 %s92, 1
      %p96 = scmp.eq.s32.totalorder %s16, 3
      %p97 = scmp.ne.s32.totalorder %s92, %s94
      %p98 = scmp.eq.s32.totalorder %s16, 0
      %p99 = por %p97, %p98
      %p100 = scmp.ne.s32.totalorder %s92, %s94
      %p101 = scmp.eq.s32.totalorder %s21, 3
      %p102 = por %p100, %p101
      %p103 = scmp.ne.s32.totalorder %s94, %s95
      %p104 = scmp.eq.s32.totalorder %s21, 0
      %p105 = por %p103, %p104
      %p106 = scmp.ne.s32.totalorder %s94, %s95
      %p107 = scmp.eq.s32.totalorder %s22, 3
      %p108 = por %p106, %p107
      %p110 = scmp.ne.s32.totalorder %s95, %s109
      %p111 = scmp.eq.s32.totalorder %s22, 0
      %p112 = por %p110, %p111
      %s114 = sadd.s32 %s113, 1
      %p117 = scmp.eq.s32.totalorder %s16, 3
      %p118 = scmp.ne.s32.totalorder %s113, %s115
      %p119 = scmp.eq.s32.totalorder %s16, 0
      %p120 = por %p118, %p119
      %p121 = scmp.ne.s32.totalorder %s113, %s115
      %p122 = scmp.eq.s32.totalorder %s21, 3
      %p123 = por %p121, %p122
      %p124 = scmp.ne.s32.totalorder %s115, %s116
      %p125 = scmp.eq.s32.totalorder %s21, 0
      %p126 = por %p124, %p125
      %p127 = scmp.ne.s32.totalorder %s115, %s116
      %p128 = scmp.eq.s32.totalorder %s22, 3
      %p129 = por %p127, %p128
      %p131 = scmp.ne.s32.totalorder %s116, %s130
      %p132 = scmp.eq.s32.totalorder %s22, 0
      %p133 = por %p131, %p132
      %s135 = sadd.s32 %s134, 1
      %p138 = scmp.eq.s32.totalorder %s16, 3
      %p139 = scmp.ne.s32.totalorder %s134, %s136
      %p140 = scmp.eq.s32.totalorder %s16, 0
      %p141 = por %p139, %p140
      %p142 = scmp.ne.s32.totalorder %s134, %s136
      %p143 = scmp.eq.s32.totalorder %s21, 3
      %p144 = por %p142, %p143
      %p145 = scmp.ne.s32.totalorder %s136, %s137
      %p146 = scmp.eq.s32.totalorder %s21, 0
      %p147 = por %p145, %p146
      %p148 = scmp.ne.s32.totalorder %s136, %s137
      %p149 = scmp.eq.s32.totalorder %s22, 3
      %p150 = por %p148, %p149
      %p152 = scmp.ne.s32.totalorder %s137, %s151
      %p153 = scmp.eq.s32.totalorder %s22, 0
      %p154 = por %p152, %p153
      %s156 = sadd.s32 %s155, 1
      %p159 = scmp.eq.s32.totalorder %s16, 3
      %p160 = scmp.ne.s32.totalorder %s155, %s157
      %p161 = scmp.eq.s32.totalorder %s16, 0
      %p162 = por %p160, %p161
      %p163 = scmp.ne.s32.totalorder %s155, %s157
      %p164 = scmp.eq.s32.totalorder %s21, 3
      %p165 = por %p163, %p164
      %p166 = scmp.ne.s32.totalorder %s157, %s158
      %p167 = scmp.eq.s32.totalorder %s21, 0
      %p168 = por %p166, %p167
      %p169 = scmp.ne.s32.totalorder %s157, %s158
      %p170 = scmp.eq.s32.totalorder %s22, 3
      %p171 = por %p169, %p170
      %p173 = scmp.ne.s32.totalorder %s158, %s172
      %p174 = scmp.eq.s32.totalorder %s22, 0
      %p175 = por %p173, %p174
      %s176 = ssub.s32 %s16, %s23
      %p177 = scmp.eq.s32.totalorder %s176, 0
      %s179 = sadd.s32 %s178, 1
      %s180 = scalar_select %p177, %s178, %s179
      %p183 = pneg %p177
      %p184 = scmp.eq.s32.totalorder %s16, 3
      %p185 = por %p183, %p184
      %p186 = scmp.ne.s32.totalorder %s178, %s181
      %p187 = scmp.eq.s32.totalorder %s16, 0
      %p188 = por %p186, %p187
      %p189 = scmp.ne.s32.totalorder %s178, %s181
      %p190 = scmp.eq.s32.totalorder %s21, 3
      %p191 = por %p189, %p190
      %p192 = scmp.ne.s32.totalorder %s181, %s182
      %p193 = scmp.eq.s32.totalorder %s21, 0
      %p194 = por %p192, %p193
      %p195 = scmp.ne.s32.totalorder %s181, %s182
      %p196 = scmp.eq.s32.totalorder %s22, 3
      %p197 = por %p195, %p196
      %p199 = scmp.ne.s32.totalorder %s182, %s198
      %p200 = scmp.eq.s32.totalorder %s22, 0
      %p201 = por %p199, %p200
      %p202 = scmp.le.s32.totalorder 1, %s16
      %p203 = scmp.lt.s32.totalorder %s16, 5
      %p204 = pnand %p202, %p203
      %p205 = pneg %p204
      // Predicated region
      $region9: #{tpu_custom_call.1} parent=5 // pred_check
        _
      $region10: #{tpu_custom_call.1} parent=5 // pred_check_branch
        %207 = sbr.rel (%p204) target = $region12
      $region11: #{tpu_custom_call.1} parent=5 // pred_region
        %s208 = ssub.s32 %s16, 1
        // Predicated region
        $region13: #{tpu_custom_call.1} parent=11 // pred_check
          %p209 = pneg %p63
        $region14: #{tpu_custom_call.1} parent=11 // pred_check_branch
          %211 = sbr.rel (%p209) target = $region16
        $region15: #{tpu_custom_call.1} parent=11 // pred_region
          _
        $region16: #{tpu_custom_call.1} parent=11 // pred_fallthru
          _
        // Predicated region
        $region17: #{tpu_custom_call.1} parent=11 // pred_check
          %p212 = pneg %p84
        $region18: #{tpu_custom_call.1} parent=11 // pred_check_branch
          %214 = sbr.rel (%p212) target = $region20
        $region19: #{tpu_custom_call.1} parent=11 // pred_region
          _
        $region20: #{tpu_custom_call.1} parent=11 // pred_fallthru
          _
        // Predicated region
        $region21: #{tpu_custom_call.1} parent=11 // pred_check
          %p215 = pneg %p105
        $region22: #{tpu_custom_call.1} parent=11 // pred_check_branch
          %217 = sbr.rel (%p215) target = $region24
        $region23: #{tpu_custom_call.1} parent=11 // pred_region
          %219 = vsyncadd [#allocation4], 0
          %s220 = sshll.u32 %s3, 4
          %s221 = int_to_ptr.hbm [resolvable:$true] %s220
          %s222 = sshll.u32 [#allocation3], 4
          %s223 = int_to_ptr.vmem [resolvable:$true] %s222
          %228 = dma.hbm_to_vmem [thread:$0]  %s221, 4096, %s223, [#allocation4], 64, 64, 4
        $region24: #{tpu_custom_call.1} parent=11 // pred_fallthru
          _
        // Predicated region
        $region25: #{tpu_custom_call.1} parent=11 // pred_check
          %p229 = pneg %p126
        $region26: #{tpu_custom_call.1} parent=11 // pred_check_branch
          %231 = sbr.rel (%p229) target = $region28
        $region27: #{tpu_custom_call.1} parent=11 // pred_region
          _
        $region28: #{tpu_custom_call.1} parent=11 // pred_fallthru
          _
        // Predicated region
        $region29: #{tpu_custom_call.1} parent=11 // pred_check
          %p232 = pneg %p147
        $region30: #{tpu_custom_call.1} parent=11 // pred_check_branch
          %234 = sbr.rel (%p232) target = $region32
        $region31: #{tpu_custom_call.1} parent=11 // pred_region
          _
        $region32: #{tpu_custom_call.1} parent=11 // pred_fallthru
          _
        // Predicated region
        $region33: #{tpu_custom_call.1} parent=11 // pred_check
          %p235 = pneg %p168
        $region34: #{tpu_custom_call.1} parent=11 // pred_check_branch
          %237 = sbr.rel (%p235) target = $region36
        $region35: #{tpu_custom_call.1} parent=11 // pred_region
          _
        $region36: #{tpu_custom_call.1} parent=11 // pred_fallthru
          _
      $region12: #{tpu_custom_call.1} parent=5 // pred_fallthru
        _
      %p238 = scmp.lt.s32.totalorder %s16, 4
      // Predicated region
      $region37: #{tpu_custom_call.1} parent=5 // pred_check
        %p239 = pneg %p238
      $region38: #{tpu_custom_call.1} parent=5 // pred_check_branch
        %241 = sbr.rel (%p239) target = $region40
      $region39: #{tpu_custom_call.1} parent=5 // pred_region
        // Predicated region
        $region41: #{tpu_custom_call.1} parent=39 // pred_check
          %p242 = pneg %p36
        $region42: #{tpu_custom_call.1} parent=39 // pred_check_branch
          %244 = sbr.rel (%p242) target = $region44
        $region43: #{tpu_custom_call.1} parent=39 // pred_region
          %s245 = smul.u32 2, %s16
          %p246 = scmp.lt.s32.totalorder %s245, 7
          %s247 = scalar_select %p246, %s245, 7
          %s248 = smul.addr %s247, 8
          %s249 = scalar_lea.vmem %s0, %s248
          %s250 = smul.u32 2, %s16
        $region44: #{tpu_custom_call.1} parent=39 // pred_fallthru
          _
      $region40: #{tpu_custom_call.1} parent=5 // pred_fallthru
        _
      %p251 = scmp.le.s32.totalorder 1, %s16
      %p252 = scmp.lt.s32.totalorder %s16, 5
      %p253 = pnand %p251, %p252
      %p254 = pneg %p253
      // Predicated region
      $region45: #{tpu_custom_call.1} parent=5 // pred_check
        _
      $region46: #{tpu_custom_call.1} parent=5 // pred_check_branch
        %256 = sbr.rel (%p253) target = $region48
      $region47: #{tpu_custom_call.1} parent=5 // pred_region
        %s257 = ssub.s32 %s16, 1
        // Predicated region
        $region49: #{tpu_custom_call.1} parent=47 // pred_check
          %p258 = pneg %p105
        $region50: #{tpu_custom_call.1} parent=47 // pred_check_branch
          %260 = sbr.rel (%p258) target = $region52
        $region51: #{tpu_custom_call.1} parent=47 // pred_region
          %262 = dma.done [#allocation4], 4096
        $region52: #{tpu_custom_call.1} parent=47 // pred_fallthru
          _
        %s263 = smul.u32 2, %s21
        %p264 = scmp.lt.s32.totalorder %s263, 7
        %s265 = scalar_select %p264, %s263, 7
        %s266 = smul.addr %s265, 8
        %s267 = scalar_lea.vmem %s0, %s266
        %p268 = pneg %p42
        %p269 = pneg %p39
        %p270 = pneg %p63
        %p271 = pneg %p60
        %p272 = pneg %p84
        %p273 = pneg %p81
        %p274 = pneg %p105
        %p275 = pneg %p102
        %p276 = pneg %p126
        %p277 = pneg %p123
        %p278 = pneg %p147
        %p279 = pneg %p144
        %p280 = pneg %p168
        %p281 = pneg %p165
        %p282 = pneg %p194
        %p283 = pneg %p191
        %s284 = smul.u32 2, %s21
        %p285 = scmp.lt.s32.totalorder %s284, 7
        %s286 = scalar_select %p285, %s284, 7
        %s287 = smul.addr %s286, 8
        %s288 = scalar_lea.vmem %s7, %s287
        %s289 = smul.u32 2, %s21
        %p290 = scmp.lt.s32.totalorder %s289, 7
        %s291 = scalar_select %p290, %s289, 7
        %s292 = smul.addr %s291, 8
        %s293 = scalar_lea.vmem %s0, %s292
        %s294 = smul.u32 2, %s21
        %s295 = smul.u32 2, %s21
        %p296 = scmp.lt.s32.totalorder %s295, 7
        %s297 = scalar_select %p296, %s295, 7
        %s298 = smul.addr %s297, 8
        %s299 = scalar_lea.vmem %s7, %s298
        %s300 = smul.u32 2, %s21
        %v302 = vld [vmem:[%s293] sm:$0xff]
        %v303 = vld [vmem:[%s293 + $0x8] sm:$0xff]
        %v304 = vpack.c.bf16 %v303, %v302
        %v305 = vld [vmem:[%s1] sm:$0xff]
        %v306 = vld [vmem:[%s1 + $0x8] sm:$0xff]
        %v307 = vld [vmem:[%s1 + $0x10] sm:$0xff]
        %v308 = vld [vmem:[%s1 + $0x18] sm:$0xff]
        %v309 = vld [vmem:[%s1 + $0x20] sm:$0xff]
        %v310 = vld [vmem:[%s1 + $0x28] sm:$0xff]
        %v311 = vld [vmem:[%s1 + $0x30] sm:$0xff]
        %v312 = vld [vmem:[%s1 + $0x38] sm:$0xff]
        %v313 = vld [vmem:[%s2] sm:$0xf]
        %v315 = vperm.slane %v313, 0
        %v316 = vperm.slane %v313, 1
        %v317 = vperm.slane %v313, 2
        %v318 = vperm.slane %v313, 3
        %v331 = vunpack.c.l.b16 %v305
        %v332 = vunpack.c.h.b16 %v305
        %v333 = vunpack.c.l.b16 %v306
        %v334 = vunpack.c.h.b16 %v306
        %v335 = vunpack.c.l.b16 %v307
        %v336 = vunpack.c.h.b16 %v307
        %v337 = vunpack.c.l.b16 %v308
        %v338 = vunpack.c.h.b16 %v308
        %v339 = vunpack.c.l.b16 %v309
        %v340 = vunpack.c.h.b16 %v309
        %v341 = vunpack.c.l.b16 %v310
        %v342 = vunpack.c.h.b16 %v310
        %v343 = vunpack.c.l.b16 %v311
        %v344 = vunpack.c.h.b16 %v311
        %v345 = vunpack.c.l.b16 %v312
        %v346 = vunpack.c.h.b16 %v312
        %v347 = vpack.c.b16 %v335, %v331
        %v348 = vpack.c.b16 %v336, %v332
        %v349 = vpack.c.b16 %v337, %v333
        %v350 = vpack.c.b16 %v338, %v334
        %v351 = vpack.c.b16 %v343, %v339
        %v352 = vpack.c.b16 %v344, %v340
        %v353 = vpack.c.b16 %v345, %v341
        %v354 = vpack.c.b16 %v346, %v342
        %vm363 = vcmask 261120
        %v365 = vsel %vm363, %v304, 0
        %367 = vmatpush.bf16.msra.mxu0 0
        %368 = vmatpush.bf16.msra.mxu0 0
        %369 = vmatpush.bf16.msra.mxu0 0
        %370 = vmatpush.bf16.msra.mxu0 0
        %371 = vmatpush.bf16.msra.mxu0 0
        %372 = vmatpush.bf16.msra.mxu0 0
        %373 = vmatpush.bf16.msra.mxu0 %v351
        %374 = vmatpush.bf16.msra.mxu0 %v347
        %375 = vmatmul.bf16.gmra.mxu0 %v365
        %v376 = vpop.f32.mrf.mxu0
        %v377 = vadd.f32 %v315, %v376
        %v378 = vpop.f32.mrf.mxu0
        %v379 = vadd.f32 %v315, %v378
        %380 = vdwg.mxu0
        %381 = vmatpush.bf16.msra.mxu0 0
        %382 = vmatpush.bf16.msra.mxu0 0
        %383 = vmatpush.bf16.msra.mxu0 0
        %384 = vmatpush.bf16.msra.mxu0 0
        %385 = vmatpush.bf16.msra.mxu0 0
        %386 = vmatpush.bf16.msra.mxu0 0
        %387 = vmatpush.bf16.msra.mxu0 %v352
        %388 = vmatpush.bf16.msra.mxu0 %v348
        %389 = vmatmul.bf16.gmra.mxu0 %v365
        %v390 = vpop.f32.mrf.mxu0
        %v391 = vadd.f32 %v316, %v390
        %v392 = vpop.f32.mrf.mxu0
        %v393 = vadd.f32 %v316, %v392
        %394 = vdwg.mxu0
        %395 = vmatpush.bf16.msra.mxu0 0
        %396 = vmatpush.bf16.msra.mxu0 0
        %397 = vmatpush.bf16.msra.mxu0 0
        %398 = vmatpush.bf16.msra.mxu0 0
        %399 = vmatpush.bf16.msra.mxu0 0
        %400 = vmatpush.bf16.msra.mxu0 0
        %401 = vmatpush.bf16.msra.mxu0 %v353
        %402 = vmatpush.bf16.msra.mxu0 %v349
        %403 = vmatmul.bf16.gmra.mxu0 %v365
        %v404 = vpop.f32.mrf.mxu0
        %v405 = vadd.f32 %v317, %v404
        %v406 = vpop.f32.mrf.mxu0
        %v407 = vadd.f32 %v317, %v406
        %408 = vdwg.mxu0
        %409 = vmatpush.bf16.msra.mxu0 0
        %410 = vmatpush.bf16.msra.mxu0 0
        %411 = vmatpush.bf16.msra.mxu0 0
        %412 = vmatpush.bf16.msra.mxu0 0
        %413 = vmatpush.bf16.msra.mxu0 0
        %414 = vmatpush.bf16.msra.mxu0 0
        %415 = vmatpush.bf16.msra.mxu0 %v354
        %416 = vmatpush.bf16.msra.mxu0 %v350
        %417 = vmatmul.bf16.gmra.mxu0 %v365
        %v418 = vpop.f32.mrf.mxu0
        %v419 = vadd.f32 %v318, %v418
        %v420 = vpop.f32.mrf.mxu0
        %v421 = vadd.f32 %v318, %v420
        %422 = vdwg.mxu0
        %v423 = vmax.f32 %v377, 0.0
        %v424 = vmax.f32 %v391, 0.0
        %v425 = vmax.f32 %v405, 0.0
        %v426 = vmax.f32 %v419, 0.0
        %v427 = vmax.f32 %v379, 0.0
        %v428 = vmax.f32 %v393, 0.0
        %v429 = vmax.f32 %v407, 0.0
        %v430 = vmax.f32 %v421, 0.0
        %v431 = vpack.c.bf16 %v427, %v423
        %v432 = vpack.c.bf16 %v428, %v424
        %v433 = vpack.c.bf16 %v429, %v425
        %v434 = vpack.c.bf16 %v430, %v426
        %v435 = vld [vmem:[#allocation3] sm:$0xf]
        %v436 = vld [vmem:[#allocation3 + $0x4] sm:$0xf]
        %v437 = vld [vmem:[#allocation3 + $0x8] sm:$0xf]
        %v438 = vld [vmem:[#allocation3 + $0xc] sm:$0xf]
        %v439 = vld [vmem:[#allocation3 + $0x10] sm:$0xf]
        %v440 = vld [vmem:[#allocation3 + $0x14] sm:$0xf]
        %v441 = vld [vmem:[#allocation3 + $0x18] sm:$0xf]
        %v442 = vld [vmem:[#allocation3 + $0x1c] sm:$0xf]
        %v443 = vld [vmem:[#allocation3 + $0x20] sm:$0xf]
        %v444 = vld [vmem:[#allocation3 + $0x24] sm:$0xf]
        %v445 = vld [vmem:[#allocation3 + $0x28] sm:$0xf]
        %v446 = vld [vmem:[#allocation3 + $0x2c] sm:$0xf]
        %v447 = vld [vmem:[#allocation3 + $0x30] sm:$0xf]
        %v448 = vld [vmem:[#allocation3 + $0x34] sm:$0xf]
        %v449 = vld [vmem:[#allocation3 + $0x38] sm:$0xf]
        %v450 = vld [vmem:[#allocation3 + $0x3c] sm:$0xf]
        %v451 = vld [vmem:[#allocation3 + $0x40] sm:$0xf]
        %v452 = vld [vmem:[#allocation3 + $0x44] sm:$0xf]
        %v453 = vld [vmem:[#allocation3 + $0x48] sm:$0xf]
        %v454 = vld [vmem:[#allocation3 + $0x4c] sm:$0xf]
        %v455 = vld [vmem:[#allocation3 + $0x50] sm:$0xf]
        %v456 = vld [vmem:[#allocation3 + $0x54] sm:$0xf]
        %v457 = vld [vmem:[#allocation3 + $0x58] sm:$0xf]
        %v458 = vld [vmem:[#allocation3 + $0x5c] sm:$0xf]
        %v459 = vld [vmem:[#allocation3 + $0x60] sm:$0xf]
        %v460 = vld [vmem:[#allocation3 + $0x64] sm:$0xf]
        %v461 = vld [vmem:[#allocation3 + $0x68] sm:$0xf]
        %v462 = vld [vmem:[#allocation3 + $0x6c] sm:$0xf]
        %v463 = vld [vmem:[#allocation3 + $0x70] sm:$0xf]
        %v464 = vld [vmem:[#allocation3 + $0x74] sm:$0xf]
        %v465 = vld [vmem:[#allocation3 + $0x78] sm:$0xf]
        %v466 = vld [vmem:[#allocation3 + $0x7c] sm:$0xf]
        %v467 = vld [vmem:[#allocation3 + $0x80] sm:$0xf]
        %v468 = vld [vmem:[#allocation3 + $0x84] sm:$0xf]
        %v469 = vld [vmem:[#allocation3 + $0x88] sm:$0xf]
        %v470 = vld [vmem:[#allocation3 + $0x8c] sm:$0xf]
        %v471 = vld [vmem:[#allocation3 + $0x90] sm:$0xf]
        %v472 = vld [vmem:[#allocation3 + $0x94] sm:$0xf]
        %v473 = vld [vmem:[#allocation3 + $0x98] sm:$0xf]
        %v474 = vld [vmem:[#allocation3 + $0x9c] sm:$0xf]
        %v475 = vld [vmem:[#allocation3 + $0xa0] sm:$0xf]
        %v476 = vld [vmem:[#allocation3 + $0xa4] sm:$0xf]
        %v477 = vld [vmem:[#allocation3 + $0xa8] sm:$0xf]
        %v478 = vld [vmem:[#allocation3 + $0xac] sm:$0xf]
        %v479 = vld [vmem:[#allocation3 + $0xb0] sm:$0xf]
        %v480 = vld [vmem:[#allocation3 + $0xb4] sm:$0xf]
        %v481 = vld [vmem:[#allocation3 + $0xb8] sm:$0xf]
        %v482 = vld [vmem:[#allocation3 + $0xbc] sm:$0xf]
        %v483 = vld [vmem:[#allocation3 + $0xc0] sm:$0xf]
        %v484 = vld [vmem:[#allocation3 + $0xc4] sm:$0xf]
        %v485 = vld [vmem:[#allocation3 + $0xc8] sm:$0xf]
        %v486 = vld [vmem:[#allocation3 + $0xcc] sm:$0xf]
        %v487 = vld [vmem:[#allocation3 + $0xd0] sm:$0xf]
        %v488 = vld [vmem:[#allocation3 + $0xd4] sm:$0xf]
        %v489 = vld [vmem:[#allocation3 + $0xd8] sm:$0xf]
        %v490 = vld [vmem:[#allocation3 + $0xdc] sm:$0xf]
        %v491 = vld [vmem:[#allocation3 + $0xe0] sm:$0xf]
        %v492 = vld [vmem:[#allocation3 + $0xe4] sm:$0xf]
        %v493 = vld [vmem:[#allocation3 + $0xe8] sm:$0xf]
        %v494 = vld [vmem:[#allocation3 + $0xec] sm:$0xf]
        %v495 = vld [vmem:[#allocation3 + $0xf0] sm:$0xf]
        %v496 = vld [vmem:[#allocation3 + $0xf4] sm:$0xf]
        %v497 = vld [vmem:[#allocation3 + $0xf8] sm:$0xf]
        %v498 = vld [vmem:[#allocation3 + $0xfc] sm:$0xf]
        %v499 = vld [vmem:[%s4] sm:$0x1]
        %v501 = vperm.slane %v499, 0
        %v567 = vunpack.c.l.b16 %v435
        %v568 = vunpack.c.l.b16 %v436
        %v569 = vunpack.c.l.b16 %v437
        %v570 = vunpack.c.l.b16 %v438
        %v571 = vunpack.c.l.b16 %v439
        %v572 = vunpack.c.l.b16 %v440
        %v573 = vunpack.c.l.b16 %v441
        %v574 = vunpack.c.l.b16 %v442
        %v575 = vunpack.c.l.b16 %v443
        %v576 = vunpack.c.l.b16 %v444
        %v577 = vunpack.c.l.b16 %v445
        %v578 = vunpack.c.l.b16 %v446
        %v579 = vunpack.c.l.b16 %v447
        %v580 = vunpack.c.l.b16 %v448
        %v581 = vunpack.c.l.b16 %v449
        %v582 = vunpack.c.l.b16 %v450
        %v583 = vunpack.c.l.b16 %v451
        %v584 = vunpack.c.l.b16 %v452
        %v585 = vunpack.c.l.b16 %v453
        %v586 = vunpack.c.l.b16 %v454
        %v587 = vunpack.c.l.b16 %v455
        %v588 = vunpack.c.l.b16 %v456
        %v589 = vunpack.c.l.b16 %v457
        %v590 = vunpack.c.l.b16 %v458
        %v591 = vunpack.c.l.b16 %v459
        %v592 = vunpack.c.l.b16 %v460
        %v593 = vunpack.c.l.b16 %v461
        %v594 = vunpack.c.l.b16 %v462
        %v595 = vunpack.c.l.b16 %v463
        %v596 = vunpack.c.l.b16 %v464
        %v597 = vunpack.c.l.b16 %v465
        %v598 = vunpack.c.l.b16 %v466
        %v599 = vunpack.c.l.b16 %v467
        %v600 = vunpack.c.l.b16 %v468
        %v601 = vunpack.c.l.b16 %v469
        %v602 = vunpack.c.l.b16 %v470
        %v603 = vunpack.c.l.b16 %v471
        %v604 = vunpack.c.l.b16 %v472
        %v605 = vunpack.c.l.b16 %v473
        %v606 = vunpack.c.l.b16 %v474
        %v607 = vunpack.c.l.b16 %v475
        %v608 = vunpack.c.l.b16 %v476
        %v609 = vunpack.c.l.b16 %v477
        %v610 = vunpack.c.l.b16 %v478
        %v611 = vunpack.c.l.b16 %v479
        %v612 = vunpack.c.l.b16 %v480
        %v613 = vunpack.c.l.b16 %v481
        %v614 = vunpack.c.l.b16 %v482
        %v615 = vunpack.c.l.b16 %v483
        %v616 = vunpack.c.l.b16 %v484
        %v617 = vunpack.c.l.b16 %v485
        %v618 = vunpack.c.l.b16 %v486
        %v619 = vunpack.c.l.b16 %v487
        %v620 = vunpack.c.l.b16 %v488
        %v621 = vunpack.c.l.b16 %v489
        %v622 = vunpack.c.l.b16 %v490
        %v623 = vunpack.c.l.b16 %v491
        %v624 = vunpack.c.l.b16 %v492
        %v625 = vunpack.c.l.b16 %v493
        %v626 = vunpack.c.l.b16 %v494
        %v627 = vunpack.c.l.b16 %v495
        %v628 = vunpack.c.l.b16 %v496
        %v629 = vunpack.c.l.b16 %v497
        %v630 = vunpack.c.l.b16 %v498
        %v631 = vpack.c.b16 %v568, %v567
        %v632 = vpack.c.b16 %v570, %v569
        %v633 = vpack.c.b16 %v572, %v571
        %v634 = vpack.c.b16 %v574, %v573
        %v635 = vpack.c.b16 %v576, %v575
        %v636 = vpack.c.b16 %v578, %v577
        %v637 = vpack.c.b16 %v580, %v579
        %v638 = vpack.c.b16 %v582, %v581
        %v639 = vpack.c.b16 %v584, %v583
        %v640 = vpack.c.b16 %v586, %v585
        %v641 = vpack.c.b16 %v588, %v587
        %v642 = vpack.c.b16 %v590, %v589
        %v643 = vpack.c.b16 %v592, %v591
        %v644 = vpack.c.b16 %v594, %v593
        %v645 = vpack.c.b16 %v596, %v595
        %v646 = vpack.c.b16 %v598, %v597
        %v647 = vpack.c.b16 %v600, %v599
        %v648 = vpack.c.b16 %v602, %v601
        %v649 = vpack.c.b16 %v604, %v603
        %v650 = vpack.c.b16 %v606, %v605
        %v651 = vpack.c.b16 %v608, %v607
        %v652 = vpack.c.b16 %v610, %v609
        %v653 = vpack.c.b16 %v612, %v611
        %v654 = vpack.c.b16 %v614, %v613
        %v655 = vpack.c.b16 %v616, %v615
        %v656 = vpack.c.b16 %v618, %v617
        %v657 = vpack.c.b16 %v620, %v619
        %v658 = vpack.c.b16 %v622, %v621
        %v659 = vpack.c.b16 %v624, %v623
        %v660 = vpack.c.b16 %v626, %v625
        %v661 = vpack.c.b16 %v628, %v627
        %v662 = vpack.c.b16 %v630, %v629
        %695 = vmatpush.bf16.msra.mxu0 %v638
        %696 = vmatpush.bf16.msra.mxu0 %v637
        %697 = vmatpush.bf16.msra.mxu0 %v636
        %698 = vmatpush.bf16.msra.mxu0 %v635
        %699 = vmatpush.bf16.msra.mxu0 %v634
        %700 = vmatpush.bf16.msra.mxu0 %v633
        %701 = vmatpush.bf16.msra.mxu0 %v632
        %702 = vmatpush.bf16.msra.mxu0 %v631
        %703 = vmatmul.bf16.gmra.mxu0 %v431
        %v704 = vpop.f32.mrf.mxu0
        %v705 = vadd.f32 %v501, %v704
        %v706 = vpop.f32.mrf.mxu0
        %v707 = vadd.f32 %v501, %v706
        %708 = vdwg.mxu0
        %709 = vmatpush.bf16.msra.mxu0 %v646
        %710 = vmatpush.bf16.msra.mxu0 %v645
        %711 = vmatpush.bf16.msra.mxu0 %v644
        %712 = vmatpush.bf16.msra.mxu0 %v643
        %713 = vmatpush.bf16.msra.mxu0 %v642
        %714 = vmatpush.bf16.msra.mxu0 %v641
        %715 = vmatpush.bf16.msra.mxu0 %v640
        %716 = vmatpush.bf16.msra.mxu0 %v639
        %717 = vmatmul.bf16.gmra.mxu0 %v432
        %v718 = vpop.f32.mrf.mxu0
        %v719 = vadd.f32 %v705, %v718
        %v720 = vpop.f32.mrf.mxu0
        %v721 = vadd.f32 %v707, %v720
        %722 = vdwg.mxu0
        %723 = vmatpush.bf16.msra.mxu0 %v654
        %724 = vmatpush.bf16.msra.mxu0 %v653
        %725 = vmatpush.bf16.msra.mxu0 %v652
        %726 = vmatpush.bf16.msra.mxu0 %v651
        %727 = vmatpush.bf16.msra.mxu0 %v650
        %728 = vmatpush.bf16.msra.mxu0 %v649
        %729 = vmatpush.bf16.msra.mxu0 %v648
        %730 = vmatpush.bf16.msra.mxu0 %v647
        %731 = vmatmul.bf16.gmra.mxu0 %v433
        %v732 = vpop.f32.mrf.mxu0
        %v733 = vadd.f32 %v719, %v732
        %v734 = vpop.f32.mrf.mxu0
        %v735 = vadd.f32 %v721, %v734
        %736 = vdwg.mxu0
        %737 = vmatpush.bf16.msra.mxu0 %v662
        %738 = vmatpush.bf16.msra.mxu0 %v661
        %739 = vmatpush.bf16.msra.mxu0 %v660
        %740 = vmatpush.bf16.msra.mxu0 %v659
        %741 = vmatpush.bf16.msra.mxu0 %v658
        %742 = vmatpush.bf16.msra.mxu0 %v657
        %743 = vmatpush.bf16.msra.mxu0 %v656
        %744 = vmatpush.bf16.msra.mxu0 %v655
        %745 = vmatmul.bf16.gmra.mxu0 %v434
        %v746 = vpop.f32.mrf.mxu0
        %v747 = vadd.f32 %v733, %v746
        %v748 = vpop.f32.mrf.mxu0
        %v749 = vadd.f32 %v735, %v748
        %750 = vdwg.mxu0
        %v751 = vmax.f32 %v747, 0.0
        %v752 = vmax.f32 %v749, 0.0
        %v753 = vld [vmem:[%s5] sm:$0x1]
        %v755 = vperm.slane %v753, 0
        %v757 = vmul.f32 %v751, %v755
        %v758 = vmul.f32 %v752, %v755
        %759 = vadd.xlane.f32.xlu0 %v757
        %v760 = vpop.xlane.xlu0 %759
        %761 = vadd.xlane.f32.xlu0 %v758
        %v762 = vpop.xlane.xlu0 %761
        %v763 = vld [vmem:[#allocation2] sm:$0x1]
        %v765 = vperm.slane %v763, 0
        %v767 = vadd.f32 %v760, %v765
        %v768 = vadd.f32 %v762, %v765
        %vm769 = vcmask 7168
        %770 = vst.msk [vmem:[%s299] sm:$0xff] %vm769, %v767
        %771 = vst.msk [vmem:[%s299 + $0x8] sm:$0xff] %vm769, %v768
        %s772 = smul.u32 2, %s21
        %p773 = scmp.lt.s32.totalorder %s772, 7
        %s774 = scalar_select %p773, %s772, 7
        %s775 = smul.addr %s774, 8
        %s776 = scalar_lea.vmem %s7, %s775
        // Predicated region
        $region53: #{tpu_custom_call.1} parent=47 // pred_check
          %p777 = pneg %p191
        $region54: #{tpu_custom_call.1} parent=47 // pred_check_branch
          %779 = sbr.rel (%p777) target = $region56
        $region55: #{tpu_custom_call.1} parent=47 // pred_region
          %s780 = smul.u32 2, %s21
        $region56: #{tpu_custom_call.1} parent=47 // pred_fallthru
          _
      $region48: #{tpu_custom_call.1} parent=5 // pred_fallthru
        _
      %p781 = scmp.le.s32.totalorder 2, %s16
      // Predicated region
      $region57: #{tpu_custom_call.1} parent=5 // pred_check
        %p782 = pneg %p781
      $region58: #{tpu_custom_call.1} parent=5 // pred_check_branch
        %784 = sbr.rel (%p782) target = $region60
      $region59: #{tpu_custom_call.1} parent=5 // pred_region
        %s785 = ssub.s32 %s16, 2
        // Predicated region
        $region61: #{tpu_custom_call.1} parent=59 // pred_check
          %p786 = pneg %p197
        $region62: #{tpu_custom_call.1} parent=59 // pred_check_branch
          %788 = sbr.rel (%p786) target = $region64
        $region63: #{tpu_custom_call.1} parent=59 // pred_region
          %s789 = smul.u32 2, %s22
          %p790 = scmp.lt.s32.totalorder %s789, 7
          %s791 = scalar_select %p790, %s789, 7
          %s792 = smul.addr %s791, 8
          %s793 = scalar_lea.vmem %s7, %s792
        $region64: #{tpu_custom_call.1} parent=59 // pred_fallthru
          _
      $region60: #{tpu_custom_call.1} parent=5 // pred_fallthru
        _
    $region6: #{tpu_custom_call.1} parent=1 // loop_footer
      %s20 = sadd.s32 1, %s16
    $region7: #{tpu_custom_call.1} parent=1 // loop_footer_branch
      %15 = sbr.rel target = $region3
    $region8: #{tpu_custom_call.1} parent=1 // loop_exit
      _
    %794 = vsyncpa [#allocation4], 1
    %s795 = scalar_lea.sflag [#allocation4], 1
    %796 = vsyncpa %s795, 1

</llo_original>
